<compile_context>
chip_gen: v5e
topology: v5e:2x2
jax: 0.10.0
libtpu: 0.0.40
codegen_flags: <defaults>
</compile_context>

<pallas_src>
import functools

import jax
import jax.numpy as jnp
from jax.experimental import pallas as pl
from jax.experimental.pallas import tpu as pltpu

_MIB = 1 << 20
_LANE = 128


def _round_up(v, m):
    return (v + m - 1) // m * m


def _vmem_capacity_bytes():
    # Generation-aware budget (v5e/v6e: 128 MiB; v7x: 64 MiB per TensorCore).
    try:
        info = pltpu.get_tpu_info()
        cap = getattr(info, "vmem_capacity_bytes", None)
        if cap:
            return int(cap)
    except Exception:
        pass
    return 64 * _MIB  # conservative fallback


# ---------------------------------------------------------------------------
# Kernels
# ---------------------------------------------------------------------------
def _ese_fused_kernel(x_ref, w_ref, b_ref, o_ref):
    # x_ref / o_ref: (1, C, HW)   w_ref: (C, C) = weight.T scaled by 1/HW
    # b_ref: (1, C)
    # Streaming f32 pool: never materialize an f32 copy of the full tile.
    pooled = jnp.sum(x_ref[...], axis=-1, dtype=jnp.float32)              # (1, C)
    y = jnp.dot(pooled, w_ref[...],
                preferred_element_type=jnp.float32) + b_ref[...]          # (1, C)
    s = jnp.clip(y + 3.0, 0.0, 6.0) * (1.0 / 6.0)                         # hsigmoid
    # Apply in the input's native dtype; only the (1, C) scale is cast.
    o_ref[...] = x_ref[...] * s.astype(o_ref.dtype)[:, :, None]


def _ese_pool_kernel(x_ref, o_ref, *, hw_tile, rem):
    # Two-pass pass 1: tiled pooled SUM only (FC + hsigmoid done in JAX).
    # x_ref: (1, C, hw_tile)   o_ref: (1, 1, C) f32 accumulator (resident
    # across the reduction axis t: same output block index for every t).
    t = pl.program_id(1)

    @pl.when(t == 0)
    def _():
        o_ref[...] = jnp.zeros_like(o_ref)

    xb = x_ref[...]
    if rem:  # static: only generated when HW % hw_tile != 0
        # Ragged last tile: lanes >= rem contain out-of-bounds garbage and
        # must be excluded from the pooled sum.
        limit = jnp.where(t == pl.num_programs(1) - 1, rem, hw_tile)
        lane = jax.lax.broadcasted_iota(jnp.int32, xb.shape, 2)
        xb = jnp.where(lane < limit, xb, jnp.zeros_like(xb))

    o_ref[...] += jnp.sum(xb, axis=-1, dtype=jnp.float32)[:, None, :]


def _ese_apply_kernel(s_ref, x_ref, o_ref):
    # Two-pass pass 2: lane-dense elementwise apply.
    # s_ref: (1, C, 1)   x_ref / o_ref: (1, C, hw_tile)
    # (Out-of-bounds lanes of a ragged last tile are dropped on write-back.)
    o_ref[...] = x_ref[...] * s_ref[...]


# ---------------------------------------------------------------------------
# Wrapper
# ---------------------------------------------------------------------------
def ese_module(x_nchw, weight, bias, *, force_two_pass=False, hw_tile=None):
    """eSE forward: out = x * hsigmoid(conv1x1(avg_pool(x))).

    x_nchw: (N, C, H, W); weight: (C, C) or (C, C, 1, 1) conv1x1; bias: (C,).
    """
    N, C, H, W = x_nchw.shape
    HW = H * W
    dt = x_nchw.dtype
    itemsize = jnp.dtype(dt).itemsize

    # Metadata-only reshape: no pad, no copy.
    x3 = x_nchw.reshape(N, C, HW)
    w_f32 = jnp.asarray(weight, jnp.float32).reshape(C, C)   # (C_out, C_in)
    b_f32 = jnp.asarray(bias, jnp.float32)

    vmem_cap = _vmem_capacity_bytes()
    small_vmem = vmem_cap < 96 * _MIB   # proxy for v7x (64 MiB VMEM, 2 TCs)

    # Fused working set: x + out blocks, double-buffered, plus params + slack.
    sample_bytes = C * _round_up(HW, _LANE) * itemsize
    param_bytes = C * C * 4 + C * 4
    fused_vmem = 4 * sample_bytes + 2 * param_bytes + 2 * _MIB
    fused_fits = fused_vmem <= (vmem_cap - 24 * _MIB)

    # On 2-TensorCore chips with N == 1, the fused grid=(N,) path leaves a
    # core idle; the two-pass path (apply axes both "parallel") wins there.
    use_fused = ((not force_two_pass) and fused_fits
                 and not (small_vmem and N == 1))

    if use_fused:
        # ---- Single pass: whole sample resident in VMEM (2x HBM traffic). ----
        # One-time parameter prep (hoisted): transpose the 1x1 conv weight to
        # (C_in, C_out) and fold the 1/HW mean divide into it (NOT the bias).
        wt = w_f32.T * (1.0 / float(HW))
        b2d = b_f32.reshape(1, C)
        out3 = pl.pallas_call(
            _ese_fused_kernel,
            out_shape=jax.ShapeDtypeStruct((N, C, HW), dt),
            grid_spec=pltpu.PrefetchScalarGridSpec(
                num_scalar_prefetch=0,
                grid=(N,),
                in_specs=[
                    # Blocks equal full array dims => exempt from (8,128).
                    pl.BlockSpec((1, C, HW), lambda n: (n, 0, 0)),
                    pl.BlockSpec((C, C), lambda n: (0, 0)),
                    pl.BlockSpec((1, C), lambda n: (0, 0)),
                ],
                out_specs=pl.BlockSpec((1, C, HW), lambda n: (n, 0, 0)),
            ),
            compiler_params=pltpu.CompilerParams(
                dimension_semantics=("parallel",),
                vmem_limit_bytes=int(min(max(fused_vmem, 32 * _MIB),
                                         vmem_cap - 16 * _MIB)),
            ),
        )(x3, wt, b2d)
        return out3.reshape(N, C, H, W)

    # ---- Two-pass fallback: tiled pool -> (JAX) FC+hsigmoid -> tiled apply. ----
    if hw_tile is None:
        target = 4 * _MIB if small_vmem else 8 * _MIB
        hw_tile = max(_LANE, (target // (C * itemsize)) // _LANE * _LANE)
    hw_tile = int(min(_round_up(int(hw_tile), _LANE), _round_up(HW, _LANE)))
    n_t = pl.cdiv(HW, hw_tile)        # no padding of HW: ragged tile masked
    rem = HW % hw_tile
    blk = C * hw_tile * itemsize

    # Pass 1: per-sample pooled sums (reduction axis last, "arbitrary").
    pooled = pl.pallas_call(
        functools.partial(_ese_pool_kernel, hw_tile=hw_tile, rem=rem),
        out_shape=jax.ShapeDtypeStruct((N, 1, C), jnp.float32),
        grid_spec=pltpu.PrefetchScalarGridSpec(
            num_scalar_prefetch=0,
            grid=(N, n_t),
            in_specs=[pl.BlockSpec((1, C, hw_tile), lambda n, t: (n, 0, t))],
            out_specs=pl.BlockSpec((1, 1, C), lambda n, t: (n, 0, 0)),
        ),
        compiler_params=pltpu.CompilerParams(
            dimension_semantics=("parallel", "arbitrary"),
            vmem_limit_bytes=int(min(max(2 * blk + 4 * _MIB, 32 * _MIB),
                                     vmem_cap - 16 * _MIB)),
        ),
    )(x3)

    # Tiny (N,C)x(C,C) FC + hsigmoid in plain JAX: noise next to the C*HW
    # streaming traffic, and keeps the C*C weight out of pass 1's VMEM budget.
    mean = pooled[:, 0, :] * (1.0 / float(HW))
    y = mean @ w_f32.T + b_f32[None, :]
    s = (jnp.clip(y + 3.0, 0.0, 6.0) * (1.0 / 6.0)).astype(dt).reshape(N, C, 1)

    # Pass 2: lane-dense elementwise apply; both axes "parallel" so both
    # TensorCores on v7x are fed even when N == 1.
    out3 = pl.pallas_call(
        _ese_apply_kernel,
        out_shape=jax.ShapeDtypeStruct((N, C, HW), dt),
        grid_spec=pltpu.PrefetchScalarGridSpec(
            num_scalar_prefetch=0,
            grid=(N, n_t),
            in_specs=[
                pl.BlockSpec((1, C, 1), lambda n, t: (n, 0, 0)),
                pl.BlockSpec((1, C, hw_tile), lambda n, t: (n, 0, t)),
            ],
            out_specs=pl.BlockSpec((1, C, hw_tile), lambda n, t: (n, 0, t)),
        ),
        compiler_params=pltpu.CompilerParams(
            dimension_semantics=("parallel", "parallel"),
            vmem_limit_bytes=int(min(max(4 * blk + 4 * _MIB, 32 * _MIB),
                                     vmem_cap - 16 * _MIB)),
        ),
    )(s, x3)
    return out3.reshape(N, C, H, W)


# ---------------------------------------------------------------------------
# Reference + test
# ---------------------------------------------------------------------------
def _reference(x, weight, bias):
    mean = jnp.mean(x, axis=(2, 3))                       # (N, C)
    y = mean @ weight.T + bias[None, :]                   # (N, C)
    s = jnp.clip(y + 3.0, 0.0, 6.0) / 6.0
    return x * s[:, :, None, None]


if __name__ == "__main__":
    key = jax.random.PRNGKey(0)
    k_x, k_w, k_b, k_x2 = jax.random.split(key, 4)

    N, C, H, W = 2, 4, 16, 16
    x = jax.random.normal(k_x, (N, C, H, W), dtype=jnp.float32)

    # Deterministic synthetic parameters for the 1x1 conv (channel -> channel).
    weight = jax.random.normal(k_w, (C, C), dtype=jnp.float32) * 0.1
    bias = jax.random.normal(k_b, (C,), dtype=jnp.float32) * 0.1

    ref = _reference(x, weight, bias)

    # Fused (whole-sample-resident, unpadded) path.
    out = jax.block_until_ready(ese_module(x, weight, bias))
    assert out.shape == (N, C, H, W)
    assert jnp.allclose(out, ref, atol=1e-5, rtol=1e-5)

    # Two-pass (reduce -> JAX FC -> apply) fallback, forced with a small tile
    # so cross-tile accumulation is exercised.
    out2 = jax.block_until_ready(
        ese_module(x, weight, bias, force_two_pass=True, hw_tile=128))
    assert jnp.allclose(out2, ref, atol=1e-5, rtol=1e-5)

    # Non-multiple-of-128 spatial size: exercises the unpadded full-dim blocks
    # in the fused path and the ragged-last-tile mask in the two-pass pool.
    H2, W2 = 10, 13   # HW = 130
    x2 = jax.random.normal(k_x2, (N, C, H2, W2), dtype=jnp.float32)
    ref2 = _reference(x2, weight, bias)
    outa = jax.block_until_ready(ese_module(x2, weight, bias))
    assert jnp.allclose(outa, ref2, atol=1e-5, rtol=1e-5)
    outb = jax.block_until_ready(
        ese_module(x2, weight, bias, force_two_pass=True, hw_tile=128))
    assert jnp.allclose(outb, ref2, atol=1e-5, rtol=1e-5)

    print("KERNEL_OK")
</pallas_src>

<mosaic_0001>
module attributes {stable_mosaic.version = 11 : i64} {
  func.func @_ese_fused_kernel(%arg0: i32, %arg1: memref<1x4x256xf32, #tpu.memory_space<vmem>>, %arg2: memref<4x4xf32, #tpu.memory_space<vmem>>, %arg3: memref<1x4xf32, #tpu.memory_space<vmem>>, %arg4: memref<1x4x256xf32, #tpu.memory_space<vmem>>) attributes {dimension_semantics = [#tpu.dimension_semantics<parallel>], iteration_bounds = array<i64: 2>, scalar_prefetch = 0 : i64, scratch_operands = 0 : i64, tpu.core_type = #tpu.core_type<tc>, window_params = [{transform_indices = @transform_0, window_bounds = array<i64: 1, 4, 256>}, {pipeline_mode = #tpu.pipeline_mode<synchronous>, transform_indices = @transform_1, window_bounds = array<i64: 4, 4>}, {pipeline_mode = #tpu.pipeline_mode<synchronous>, transform_indices = @transform_2, window_bounds = array<i64: 1, 4>}, {transform_indices = @transform_3, window_bounds = array<i64: 1, 4, 256>}]} {
    %c0 = arith.constant 0 : index
    %c0_0 = arith.constant 0 : index
    %c0_1 = arith.constant 0 : index
    %0 = vector.load %arg1[%c0, %c0_0, %c0_1] : memref<1x4x256xf32, #tpu.memory_space<vmem>>, vector<1x4x256xf32>
    %cst = arith.constant dense<0.000000e+00> : vector<1x4xf32>
    %1 = vector.multi_reduction <add>, %0, %cst [2] : vector<1x4x256xf32> to vector<1x4xf32>
    %c0_2 = arith.constant 0 : index
    %c0_3 = arith.constant 0 : index
    %2 = vector.load %arg2[%c0_2, %c0_3] : memref<4x4xf32, #tpu.memory_space<vmem>>, vector<4x4xf32>
    %cst_4 = arith.constant dense<0.000000e+00> : vector<1x4xf32>
    %3 = tpu.matmul %1, %2, %cst_4 {dimension_numbers = #tpu.dot_dimension_numbers<[1], [0], [0], [1], [0, 0, 1, 1], [], []>} : vector<1x4xf32>, vector<4x4xf32>, vector<1x4xf32> -> vector<1x4xf32>
    %c0_5 = arith.constant 0 : index
    %c0_6 = arith.constant 0 : index
    %4 = vector.load %arg3[%c0_5, %c0_6] : memref<1x4xf32, #tpu.memory_space<vmem>>, vector<1x4xf32>
    %5 = arith.addf %3, %4 : vector<1x4xf32>
    %cst_7 = arith.constant 3.000000e+00 : f32
    %6 = vector.broadcast %cst_7 : f32 to vector<1x4xf32>
    %7 = arith.addf %5, %6 : vector<1x4xf32>
    %cst_8 = arith.constant 0.000000e+00 : f32
    %cst_9 = arith.constant 6.000000e+00 : f32
    %8 = vector.broadcast %cst_8 : f32 to vector<1x4xf32>
    %9 = arith.maximumf %8, %7 : vector<1x4xf32>
    %10 = vector.broadcast %cst_9 : f32 to vector<1x4xf32>
    %11 = arith.minimumf %10, %9 : vector<1x4xf32>
    %cst_10 = arith.constant 0.166666672 : f32
    %12 = vector.broadcast %cst_10 : f32 to vector<1x4xf32>
    %13 = arith.mulf %11, %12 : vector<1x4xf32>
    %c0_11 = arith.constant 0 : index
    %c0_12 = arith.constant 0 : index
    %c0_13 = arith.constant 0 : index
    %14 = vector.load %arg1[%c0_11, %c0_12, %c0_13] : memref<1x4x256xf32, #tpu.memory_space<vmem>>, vector<1x4x256xf32>
    %15 = vector.shape_cast %13 : vector<1x4xf32> to vector<1x4x1xf32>
    %16 = vector.broadcast %15 : vector<1x4x1xf32> to vector<1x4x256xf32>
    %17 = arith.mulf %14, %16 : vector<1x4x256xf32>
    %c0_14 = arith.constant 0 : index
    %c0_15 = arith.constant 0 : index
    %c0_16 = arith.constant 0 : index
    %18 = vector.load %arg4[%c0_14, %c0_15, %c0_16] : memref<1x4x256xf32, #tpu.memory_space<vmem>>, vector<1x4x256xf32>
    tpu.vector_store %arg4[%c0_14, %c0_15, %c0_16], %17 {strides = array<i32>} : memref<1x4x256xf32, #tpu.memory_space<vmem>>, vector<1x4x256xf32>,
    return
  }
  func.func @transform_0(%arg0: i32) -> (i32, i32, i32) {
    %c0_i32 = arith.constant 0 : i32
    %c0_i32_0 = arith.constant 0 : i32
    %c0_i32_1 = arith.constant 0 : i32
    return %arg0, %c0_i32, %c0_i32_0 : i32, i32, i32
  }
  func.func @transform_1(%arg0: i32) -> (i32, i32) {
    %c0_i32 = arith.constant 0 : i32
    %c0_i32_0 = arith.constant 0 : i32
    %c0_i32_1 = arith.constant 0 : i32
    return %c0_i32, %c0_i32_0 : i32, i32
  }
  func.func @transform_2(%arg0: i32) -> (i32, i32) {
    %c0_i32 = arith.constant 0 : i32
    %c0_i32_0 = arith.constant 0 : i32
    %c0_i32_1 = arith.constant 0 : i32
    return %c0_i32, %c0_i32_0 : i32, i32
  }
  func.func @transform_3(%arg0: i32) -> (i32, i32, i32) {
    %c0_i32 = arith.constant 0 : i32
    %c0_i32_0 = arith.constant 0 : i32
    %c0_i32_1 = arith.constant 0 : i32
    return %arg0, %c0_i32, %c0_i32_0 : i32, i32, i32
  }
}

</mosaic_0001>

<llo_original>
// kernel: tpu_custom_call.1
$region0: #{tpu_custom_call.1}
  #allocation0 [shape = 'u32[]', space=smem, size = 0x4, offset = 0x4, fixed_abs, tag = 'smem constant byte address 0x4 - core index']
  #allocation1 [shape = 'u32[72,128]{1,0:T(1,128)}', space=vmem, size = 0x9000, scoped, tag = 'internal scratch']
  %s0 = inlined_call_operand.hbm [shape: f32[2,4,256], index: 0, kind: input, shape index: {}]
  %s1 = inlined_call_operand.hbm [shape: f32[4,4], index: 1, kind: input, shape index: {}]
  %s2 = inlined_call_operand.vmem [shape: f32[1,4], index: 2, kind: input, shape index: {}]
  %s3 = inlined_call_operand.hbm [shape: f32[2,4,256], index: 3, kind: output, shape index: {}]
  %s4 = sld [smem:[#allocation0]]
  $region53: #{tpu_custom_call.1} parent=0
    _
  %s6 = ssub.s32 1, %s4
  %s7 = scalar_select 0, %s6, %s4
  $region1: #{tpu_custom_call.1} parent=0
    #allocation2 [shape = 'u8[8192]{0}', space=vmem, size = 0x2000, scoped, tag = 'input window, operand 0']
    #allocation3 [shape = 's32[2]{0}', space=sflag, size = 0x8, scoped, tag = 'scoped memory for tpu_custom_call.1']
    #allocation4 [shape = 's32[2]{0}', space=sflag, size = 0x8, scoped, tag = 'scoped memory for tpu_custom_call.1']
    #allocation5 [shape = 'u8[2048]{0}', space=vmem, size = 0x800, scoped, tag = 'input window, operand 1, single buffered']
    #allocation6 [shape = 's32[1]{0}', space=sflag, size = 0x4, scoped, tag = 'scoped memory for tpu_custom_call.1']
    #allocation7 [shape = 'u8[8192]{0}', space=vmem, size = 0x2000, scoped, tag = 'output window, operand 0']
    %8 = vsyncpa [#allocation3], 0
    %s9 = scalar_lea.sflag [#allocation3], 1
    %10 = vsyncpa %s9, 0
    %11 = vsyncpa [#allocation6], 0
    %12 = vsyncpa [#allocation4], 0
    %s13 = scalar_lea.sflag [#allocation4], 1
    %14 = vsyncpa %s13, 0
    loop: start=0, step=1, limit=4
    $region2: #{tpu_custom_call.1} parent=1 // loop_pre_header
      _
    $region3: #{tpu_custom_call.1} parent=1 // loop_header
      %s16 = sphi 0, %s20
      %p17 = scmp.ge.s32.totalorder %s16, 4
      %s26 = sphi 0, %s28
      %s29 = sphi 0, %s26
      %s30 = sphi 0, %s29
      %s46 = sphi 0, %s30
      %s50 = sphi 0, %s50
      %s52 = sphi 0, %s50
      %s53 = sphi 0, %s52
      %s67 = sphi 0, %s53
      %s71 = sphi 0, %s71
      %s73 = sphi 0, %s71
      %s74 = sphi 0, %s73
      %s88 = sphi 0, %s74
      %s94 = sphi 0, %s96
      %s97 = sphi 0, %s94
      %s98 = sphi 0, %s97
      %s114 = sphi 0, %s98
    $region4: #{tpu_custom_call.1} parent=1 // loop_header_branch
      %19 = sbr.rel (%p17) target = $region8
    $region5: #{tpu_custom_call.1} parent=1 // loop_body
      %s21 = ssub.s32 %s16, 1
      %s22 = ssub.s32 %s16, 2
      %s23 = sadd.s32 %s16, 1
      %s24 = ssub.s32 %s16, %s23
      %p25 = scmp.eq.s32.totalorder %s24, 0
      %s27 = sadd.s32 %s26, 1
      %s28 = scalar_select %p25, %s26, %s27
      %p31 = pneg %p25
      %p32 = scmp.eq.s32.totalorder %s16, 1
      %p33 = por %p31, %p32
      %p34 = scmp.ne.s32.totalorder %s26, %s29
      %p35 = scmp.eq.s32.totalorder %s16, 0
      %p36 = por %p34, %p35
      %p37 = scmp.ne.s32.totalorder %s26, %s29
      %p38 = scmp.eq.s32.totalorder %s21, 1
      %p39 = por %p37, %p38
      %p40 = scmp.ne.s32.totalorder %s29, %s30
      %p41 = scmp.eq.s32.totalorder %s21, 0
      %p42 = por %p40, %p41
      %p43 = scmp.ne.s32.totalorder %s29, %s30
      %p44 = scmp.eq.s32.totalorder %s22, 1
      %p45 = por %p43, %p44
      %p47 = scmp.ne.s32.totalorder %s30, %s46
      %p48 = scmp.eq.s32.totalorder %s22, 0
      %p49 = por %p47, %p48
      %s51 = sadd.s32 %s50, 1
      %p54 = scmp.eq.s32.totalorder %s16, 1
      %p55 = scmp.ne.s32.totalorder %s50, %s52
      %p56 = scmp.eq.s32.totalorder %s16, 0
      %p57 = por %p55, %p56
      %p58 = scmp.ne.s32.totalorder %s50, %s52
      %p59 = scmp.eq.s32.totalorder %s21, 1
      %p60 = por %p58, %p59
      %p61 = scmp.ne.s32.totalorder %s52, %s53
      %p62 = scmp.eq.s32.totalorder %s21, 0
      %p63 = por %p61, %p62
      %p64 = scmp.ne.s32.totalorder %s52, %s53
      %p65 = scmp.eq.s32.totalorder %s22, 1
      %p66 = por %p64, %p65
      %p68 = scmp.ne.s32.totalorder %s53, %s67
      %p69 = scmp.eq.s32.totalorder %s22, 0
      %p70 = por %p68, %p69
      %s72 = sadd.s32 %s71, 1
      %p75 = scmp.eq.s32.totalorder %s16, 1
      %p76 = scmp.ne.s32.totalorder %s71, %s73
      %p77 = scmp.eq.s32.totalorder %s16, 0
      %p78 = por %p76, %p77
      %p79 = scmp.ne.s32.totalorder %s71, %s73
      %p80 = scmp.eq.s32.totalorder %s21, 1
      %p81 = por %p79, %p80
      %p82 = scmp.ne.s32.totalorder %s73, %s74
      %p83 = scmp.eq.s32.totalorder %s21, 0
      %p84 = por %p82, %p83
      %p85 = scmp.ne.s32.totalorder %s73, %s74
      %p86 = scmp.eq.s32.totalorder %s22, 1
      %p87 = por %p85, %p86
      %p89 = scmp.ne.s32.totalorder %s74, %s88
      %p90 = scmp.eq.s32.totalorder %s22, 0
      %p91 = por %p89, %p90
      %s92 = ssub.s32 %s16, %s23
      %p93 = scmp.eq.s32.totalorder %s92, 0
      %s95 = sadd.s32 %s94, 1
      %s96 = scalar_select %p93, %s94, %s95
      %p99 = pneg %p93
      %p100 = scmp.eq.s32.totalorder %s16, 1
      %p101 = por %p99, %p100
      %p102 = scmp.ne.s32.totalorder %s94, %s97
      %p103 = scmp.eq.s32.totalorder %s16, 0
      %p104 = por %p102, %p103
      %p105 = scmp.ne.s32.totalorder %s94, %s97
      %p106 = scmp.eq.s32.totalorder %s21, 1
      %p107 = por %p105, %p106
      %p108 = scmp.ne.s32.totalorder %s97, %s98
      %p109 = scmp.eq.s32.totalorder %s21, 0
      %p110 = por %p108, %p109
      %p111 = scmp.ne.s32.totalorder %s97, %s98
      %p112 = scmp.eq.s32.totalorder %s22, 1
      %p113 = por %p111, %p112
      %p115 = scmp.ne.s32.totalorder %s98, %s114
      %p116 = scmp.eq.s32.totalorder %s22, 0
      %p117 = por %p115, %p116
      %p118 = scmp.le.s32.totalorder 1, %s16
      %p119 = scmp.lt.s32.totalorder %s16, 3
      %p120 = pnand %p118, %p119
      %p121 = pneg %p120
      // Predicated region
      $region9: #{tpu_custom_call.1} parent=5 // pred_check
        _
      $region10: #{tpu_custom_call.1} parent=5 // pred_check_branch
        %123 = sbr.rel (%p120) target = $region12
      $region11: #{tpu_custom_call.1} parent=5 // pred_region
        %s124 = ssub.s32 %s16, 1
        // Predicated region
        $region13: #{tpu_custom_call.1} parent=11 // pred_check
          %p125 = pneg %p63
        $region14: #{tpu_custom_call.1} parent=11 // pred_check_branch
          %127 = sbr.rel (%p125) target = $region16
        $region15: #{tpu_custom_call.1} parent=11 // pred_region
          %129 = vsyncadd [#allocation6], 0
          %s131 = sshll.u32 %s1, 4
          %s132 = int_to_ptr.hbm [resolvable:$true] %s131
          %s133 = sshll.u32 [#allocation5], 4
          %s134 = int_to_ptr.vmem [resolvable:$true] %s133
          %136 = dma.hbm_to_vmem [thread:$0]  %s132, 64, %s134, [#allocation6]
        $region16: #{tpu_custom_call.1} parent=11 // pred_fallthru
          _
        // Predicated region
        $region17: #{tpu_custom_call.1} parent=11 // pred_check
          %p137 = pneg %p84
        $region18: #{tpu_custom_call.1} parent=11 // pred_check_branch
          %139 = sbr.rel (%p137) target = $region20
        $region19: #{tpu_custom_call.1} parent=11 // pred_region
          _
        $region20: #{tpu_custom_call.1} parent=11 // pred_fallthru
          _
      $region12: #{tpu_custom_call.1} parent=5 // pred_fallthru
        _
      %p140 = scmp.lt.s32.totalorder %s16, 2
      // Predicated region
      $region21: #{tpu_custom_call.1} parent=5 // pred_check
        %p141 = pneg %p140
      $region22: #{tpu_custom_call.1} parent=5 // pred_check_branch
        %143 = sbr.rel (%p141) target = $region24
      $region23: #{tpu_custom_call.1} parent=5 // pred_region
        // Predicated region
        $region25: #{tpu_custom_call.1} parent=23 // pred_check
          %p144 = pneg %p36
        $region26: #{tpu_custom_call.1} parent=23 // pred_check_branch
          %146 = sbr.rel (%p144) target = $region28
        $region27: #{tpu_custom_call.1} parent=23 // pred_region
          %s147 = sand.u32 %s26, 1
          %s148 = scalar_lea.sflag [#allocation3], %s147
          %s149 = sand.u32 %s26, 1
          %s150 = smul.addr %s149, 8
          %s151 = scalar_lea.vmem [#allocation2], %s150
          %153 = vsyncadd %s148, 0
          %s154 = smul.addr %s16, 2
          %s155 = smul.addr %s154, 4
          %s156 = scalar_lea.hbm %s0, %s155
          %s158 = sshll.u32 %s156, 4
          %s159 = int_to_ptr.hbm [resolvable:$true] %s158
          %s160 = sshll.u32 %s151, 4
          %s161 = int_to_ptr.vmem [resolvable:$true] %s160
          %163 = dma.hbm_to_vmem [thread:$0]  %s159, 128, %s161, %s148
        $region28: #{tpu_custom_call.1} parent=23 // pred_fallthru
          _
      $region24: #{tpu_custom_call.1} parent=5 // pred_fallthru
        _
      %p164 = scmp.le.s32.totalorder 1, %s16
      %p165 = scmp.lt.s32.totalorder %s16, 3
      %p166 = pnand %p164, %p165
      %p167 = pneg %p166
      // Predicated region
      $region29: #{tpu_custom_call.1} parent=5 // pred_check
        _
      $region30: #{tpu_custom_call.1} parent=5 // pred_check_branch
        %169 = sbr.rel (%p166) target = $region32
      $region31: #{tpu_custom_call.1} parent=5 // pred_region
        %s170 = ssub.s32 %s16, 1
        %s171 = sand.u32 %s29, 1
        %s172 = scalar_lea.sflag [#allocation3], %s171
        %s173 = sand.u32 %s29, 1
        %s174 = smul.addr %s173, 8
        %s175 = scalar_lea.vmem [#allocation2], %s174
        // Predicated region
        $region33: #{tpu_custom_call.1} parent=31 // pred_check
          %p176 = pneg %p42
        $region34: #{tpu_custom_call.1} parent=31 // pred_check_branch
          %178 = sbr.rel (%p176) target = $region36
        $region35: #{tpu_custom_call.1} parent=31 // pred_region
          %180 = dma.done %s172, 128
        $region36: #{tpu_custom_call.1} parent=31 // pred_fallthru
          _
        // Predicated region
        $region37: #{tpu_custom_call.1} parent=31 // pred_check
          %p181 = pneg %p63
        $region38: #{tpu_custom_call.1} parent=31 // pred_check_branch
          %183 = sbr.rel (%p181) target = $region40
        $region39: #{tpu_custom_call.1} parent=31 // pred_region
          %185 = dma.done [#allocation6], 64
        $region40: #{tpu_custom_call.1} parent=31 // pred_fallthru
          _
        %s186 = sand.u32 %s29, 1
        %s187 = scalar_lea.sflag [#allocation3], %s186
        %s188 = sand.u32 %s29, 1
        %s189 = smul.addr %s188, 8
        %s190 = scalar_lea.vmem [#allocation2], %s189
        %p191 = pneg %p42
        %p192 = pneg %p39
        %p193 = pneg %p63
        %p194 = pneg %p60
        %p195 = pneg %p84
        %p196 = pneg %p81
        %p197 = pneg %p110
        %p198 = pneg %p107
        %s199 = sand.u32 %s97, 1
        %s200 = scalar_lea.sflag [#allocation4], %s199
        %s201 = sand.u32 %s97, 1
        %s202 = smul.addr %s201, 8
        %s203 = scalar_lea.vmem [#allocation7], %s202
        %v204 = vld [vmem:[%s175] sm:$0xff]
        %206 = vst [vmem:[#allocation1] ss:$2 sm:$0xff] %v204
        %v207 = vld.sshfl [vmem:[#allocation1] sm:$0xff pattern:$0x75316420]
        %v208 = vld.sshfl [vmem:[#allocation1 + $0x8] sm:$0xff pattern:$0x75316420]
        %vm211 = vcmask 1043456
        %v212 = vsel %vm211, %v207, 0.0
        %v213 = vsel %vm211, %v208, 0.0
        %v214 = vadd.f32 %v212, %v213
        %215 = vadd.xlane.f32.xlu0 %v214
        %v216 = vpop.xlane.xlu0 %215
        %v217 = vld [vmem:[#allocation5] sm:$0xf]
        %v218 = vld [vmem:[%s2] sm:$0x1]
        %v220 = vlaneseq
        %v221 = vand.u32 %v220, 127
        %v222 = vperm.slane %v216, %v221
        %vm223 = vcmask 31744
        %v224 = vsel %vm223, %v222, 0
        %v227 = vsel %vm211, %v217, 0
        %229 = vmatpush.msra.mxu0 0.0
        %230 = vmatpush.msra.mxu0 0.0
        %231 = vmatpush.msra.mxu0 0.0
        %232 = vmatpush.msra.mxu0 0.0
        %233 = vmatpush.msra.mxu0 0.0
        %234 = vmatpush.msra.mxu0 0.0
        %235 = vmatpush.msra.mxu0 0.0
        %236 = vmatpush.msra.mxu0 0.0
        %237 = vmatpush.msra.mxu0 0.0
        %238 = vmatpush.msra.mxu0 0.0
        %239 = vmatpush.msra.mxu0 0.0
        %240 = vmatpush.msra.mxu0 0.0
        %241 = vmatpush.msra.mxu0 0.0
        %242 = vmatpush.msra.mxu0 0.0
        %243 = vmatpush.msra.mxu0 0.0
        %244 = vmatpush.msra.mxu0 %v227
        %245 = vmatmul.f32.gmra.mxu0 %v224
        %v246 = vpop.f32.mrf.mxu0
        %v247 = vadd.f32 %v218, %v246
        %248 = vdwg.mxu0
        %v249 = vadd.f32 %v247, 3.0
        %v250 = vmax.f32 %v249, 0.0
        %v251 = vmin.f32 %v250, 6.0
        %v252 = vmul.f32 %v251, 0.16666667
        %v253 = vperm.slane %v252, 0
        %v254 = vlaneseq
        %v255 = vshrl.u32 %v254, 7
        %257 = vset.pattern.permute.xlu0 %v255
        %258 = vperm.xlu0 %257, %v253
        %v259 = vpop.permute.xlu0 %258
        %v262 = vunpack.c.l.s4 839922192
        %v263 = vunpack.c.0.s8 %v262
        %v264 = vperm.slane %v259, %v263
        %v266 = vmul.f32 %v204, %v264
        %267 = vst [vmem:[%s203] sm:$0xff] %v266
        %s268 = sand.u32 %s97, 1
        %s269 = scalar_lea.sflag [#allocation4], %s268
        %s270 = sand.u32 %s97, 1
        %s271 = smul.addr %s270, 8
        %s272 = scalar_lea.vmem [#allocation7], %s271
        // Predicated region
        $region41: #{tpu_custom_call.1} parent=31 // pred_check
          %p273 = pneg %p107
        $region42: #{tpu_custom_call.1} parent=31 // pred_check_branch
          %275 = sbr.rel (%p273) target = $region44
        $region43: #{tpu_custom_call.1} parent=31 // pred_region
          %277 = vsyncadd %s269, 0
          %s278 = smul.addr %s21, 2
          %s279 = smul.addr %s278, 4
          %s280 = scalar_lea.hbm %s3, %s279
          %s282 = sshll.u32 %s272, 4
          %s283 = int_to_ptr.vmem [resolvable:$true] %s282
          %s284 = sshll.u32 %s280, 4
          %s285 = int_to_ptr.hbm [resolvable:$true] %s284
          %287 = dma.vmem_to_hbm [thread:$0]  %s283, 128, %s285, %s269
        $region44: #{tpu_custom_call.1} parent=31 // pred_fallthru
          _
      $region32: #{tpu_custom_call.1} parent=5 // pred_fallthru
        _
      %p288 = scmp.le.s32.totalorder 2, %s16
      // Predicated region
      $region45: #{tpu_custom_call.1} parent=5 // pred_check
        %p289 = pneg %p288
      $region46: #{tpu_custom_call.1} parent=5 // pred_check_branch
        %291 = sbr.rel (%p289) target = $region48
      $region47: #{tpu_custom_call.1} parent=5 // pred_region
        %s292 = ssub.s32 %s16, 2
        // Predicated region
        $region49: #{tpu_custom_call.1} parent=47 // pred_check
          %p293 = pneg %p113
        $region50: #{tpu_custom_call.1} parent=47 // pred_check_branch
          %295 = sbr.rel (%p293) target = $region52
        $region51: #{tpu_custom_call.1} parent=47 // pred_region
          %s296 = sand.u32 %s98, 1
          %s297 = scalar_lea.sflag [#allocation4], %s296
          %s298 = sand.u32 %s98, 1
          %s299 = smul.addr %s298, 8
          %s300 = scalar_lea.vmem [#allocation7], %s299
          %302 = dma.done %s297, 128
        $region52: #{tpu_custom_call.1} parent=47 // pred_fallthru
          _
      $region48: #{tpu_custom_call.1} parent=5 // pred_fallthru
        _
    $region6: #{tpu_custom_call.1} parent=1 // loop_footer
      %s20 = sadd.s32 1, %s16
    $region7: #{tpu_custom_call.1} parent=1 // loop_footer_branch
      %15 = sbr.rel target = $region3
    $region8: #{tpu_custom_call.1} parent=1 // loop_exit
      _
    %303 = vsyncpa [#allocation3], 1
    %s304 = scalar_lea.sflag [#allocation3], 1
    %305 = vsyncpa %s304, 1
    %306 = vsyncpa [#allocation6], 1
    %307 = vsyncpa [#allocation4], 1
    %s308 = scalar_lea.sflag [#allocation4], 1
    %309 = vsyncpa %s308, 1

</llo_original>
